<compile_context>
chip_gen: v5e
topology: v5e:2x2
jax: 0.10.0
libtpu: 0.0.40
codegen_flags: <defaults>
</compile_context>

<pallas_src>
import functools

import jax
import jax.numpy as jnp
from jax.experimental import pallas as pl
from jax.experimental.pallas import tpu as pltpu


_LANE = 128


def _round_up(v, m):
    return (v + m - 1) // m * m


def _paddings(filter_size, shift):
    lp = int(round((filter_size - 1) / 2))
    rp = int((filter_size - 1) / 2)
    if shift > 0:
        lp += shift
        rp -= shift
    assert lp >= 0 and rp >= 0, "negative padding not supported in this demo"
    return lp, rp


def _fsmn_fused_kernel(x_ref, w1_ref, b1_ref, w2_ref, dw_ref, o_ref, *,
                       seq_len, filter_size, lps, residuals):
    """All FSMN layers fused; operates on one (rows, D_pad) block of rows.

    rows = (batches in this block) * seq_len, ordered (b, t); feature dim is
    padded to a lane-dense D_pad.  Block shapes:
      x_ref : (rows, D_pad)           f32
      w1_ref: (L, D_pad, H_pad)       bf16
      b1_ref: (L, 1, H_pad)           f32
      w2_ref: (L, H_pad, D_pad)       bf16
      dw_ref: (L, filter_size, D_pad) f32
      o_ref : (rows, D_pad)           f32
    """
    n_layers = w1_ref.shape[0]
    rows, d_pad = x_ref.shape

    # Position-within-sequence index of every row; hoisted once, reused by all
    # taps of all layers (static unroll => no redundant broadcasts).
    t_idx = jax.lax.broadcasted_iota(jnp.int32, (rows, d_pad), 0) % seq_len

    x = x_ref[...]                                            # f32 (rows, D_pad)

    for l in range(n_layers):
        lp = lps[l]

        # --- FeedForwardNet: relu(x @ W1 + b1) @ W2 (1x1 convs == matmuls) ---
        h = jnp.dot(x.astype(jnp.bfloat16), w1_ref[l],
                    preferred_element_type=jnp.float32)
        h = jnp.maximum(h + b1_ref[l], 0.0)                   # (rows, H_pad)
        c = jnp.dot(h.astype(jnp.bfloat16), w2_ref[l],
                    preferred_element_type=jnp.float32)       # (rows, D_pad)

        # --- MemoryBlockV2: depthwise conv along t, then "memory += context".
        # out[t] = c[t] + sum_k c[t + k - lp] * dw[k]   (zero outside [0, T))
        # Rolling the flattened (rows, D) view is safe: any element that wraps
        # across a sequence/batch boundary is exactly the one masked out.
        acc = c
        for k in range(filter_size):
            s = k - lp
            dw_row = dw_ref[l, k:k + 1, :]                    # (1, D_pad)
            if s == 0:
                acc = acc + c * dw_row
            else:
                rolled = pltpu.roll(c, shift=(-s) % rows, axis=0)  # XLU roll
                lo, hi = lp - k, seq_len + lp - k                  # static ints
                mask = (t_idx >= lo) & (t_idx < hi)
                acc = acc + jnp.where(mask, rolled, 0.0) * dw_row

        if residuals[l]:                                      # encoder residual
            acc = acc + x
        x = acc

    o_ref[...] = x


def init_fsmn_params(key, filter_size, fsmn_num_layers, input_dim,
                     num_memory_units, ffn_inner_dim):
    """Deterministic synthetic parameters (shapes match the PyTorch module)."""
    params = []
    d_in = input_dim
    for _ in range(fsmn_num_layers):
        key, k1, k2, k3, k4 = jax.random.split(key, 5)
        # w_1: Conv1d(d_in, ffn_inner, 1) -> stored as (d_in, d_hid)
        w1 = jax.random.normal(k1, (d_in, ffn_inner_dim), jnp.float32) / jnp.sqrt(d_in)
        b1 = jax.random.normal(k2, (ffn_inner_dim,), jnp.float32) * 0.01
        # w_2: Conv1d(ffn_inner, d_mem, 1, bias=False) -> (d_hid, d_mem)
        w2 = jax.random.normal(k3, (ffn_inner_dim, num_memory_units),
                               jnp.float32) / jnp.sqrt(ffn_inner_dim)
        # depthwise conv weight (d, 1, filter_size) -> stored as (filter_size, d)
        dw = jax.random.normal(k4, (filter_size, num_memory_units),
                               jnp.float32) * 0.1
        params.append((w1, b1, w2, dw))
        d_in = num_memory_units
    return params


def fsmn_encoder_v2(x, params, *, filter_size, shift, target_rows=256):
    """Pallas forward. x: (B, T, input_dim) -> (B, T, num_memory_units)."""
    B, T, input_dim = x.shape
    n_layers = len(params)
    shifts = shift if isinstance(shift, list) else [shift] * n_layers
    lps = tuple(_paddings(filter_size, s)[0] for s in shifts)

    num_mem = params[0][2].shape[1]
    ffn_inner = params[0][0].shape[1]
    d_pad = _round_up(max(input_dim, num_mem), _LANE)
    h_pad = _round_up(ffn_inner, _LANE)

    # Residual applied when a layer's (unpadded) output dim matches its input dim.
    residuals, d_in = [], input_dim
    for (w1, b1, w2, dw) in params:
        d_out = w2.shape[1]
        residuals.append(d_out == d_in)
        d_in = d_out
    residuals = tuple(residuals)

    # One-time weight padding (lane-dense, MXU-aligned) + bf16 cast for MXU inputs.
    def pad2(a, s0, s1):
        return jnp.pad(a, ((0, s0 - a.shape[0]), (0, s1 - a.shape[1])))

    W1 = jnp.stack([pad2(p[0], d_pad, h_pad) for p in params]).astype(jnp.bfloat16)
    B1 = jnp.stack([jnp.pad(p[1], (0, h_pad - p[1].shape[0]))[None, :]
                    for p in params]).astype(jnp.float32)
    W2 = jnp.stack([pad2(p[2], h_pad, d_pad) for p in params]).astype(jnp.bfloat16)
    DW = jnp.stack([pad2(p[3], filter_size, d_pad) for p in params]).astype(jnp.float32)

    # Row blocking: collapse (batch, T) into matmul M; each block holds whole
    # sequences so the in-kernel roll/mask stays per-sequence correct.
    if B * T <= target_rows or T % 8 != 0:
        bt = B                                  # one block = all rows
    else:
        bt = max(1, target_rows // T)
        while B % bt != 0:
            bt -= 1
    rows_per_block = bt * T
    grid = (B // bt,)

    xp = jnp.pad(x, ((0, 0), (0, 0), (0, d_pad - input_dim)))
    xp = xp.reshape(B * T, d_pad).astype(jnp.float32)

    kernel = functools.partial(
        _fsmn_fused_kernel, seq_len=T, filter_size=filter_size,
        lps=lps, residuals=residuals)

    out = pl.pallas_call(
        kernel,
        out_shape=jax.ShapeDtypeStruct((B * T, d_pad), jnp.float32),
        grid=grid,
        in_specs=[
            pl.BlockSpec((rows_per_block, d_pad), lambda i: (i, 0)),
            pl.BlockSpec(W1.shape, lambda i: (0, 0, 0)),
            pl.BlockSpec(B1.shape, lambda i: (0, 0, 0)),
            pl.BlockSpec(W2.shape, lambda i: (0, 0, 0)),
            pl.BlockSpec(DW.shape, lambda i: (0, 0, 0)),
        ],
        out_specs=pl.BlockSpec((rows_per_block, d_pad), lambda i: (i, 0)),
        compiler_params=pltpu.CompilerParams(
            dimension_semantics=("parallel",)),
    )(xp, W1, B1, W2, DW)

    return out.reshape(B, T, d_pad)[:, :, :num_mem]


def fsmn_encoder_v2_ref(x, params, *, filter_size, shift):
    """Pure-JAX f32 reference mirroring the PyTorch forward (eval mode)."""
    n_layers = len(params)
    shifts = shift if isinstance(shift, list) else [shift] * n_layers
    for (w1, b1, w2, dw), sh in zip(params, shifts):
        lp, rp = _paddings(filter_size, sh)
        h = jnp.maximum(jnp.einsum('bti,ih->bth', x, w1) + b1[None, None, :], 0.0)
        c = jnp.einsum('bth,ho->bto', h, w2)
        B, T, d = c.shape
        pad = jnp.pad(c, ((0, 0), (lp, rp), (0, 0)))
        out = c
        for k in range(filter_size):
            out = out + pad[:, k:k + T, :] * dw[k][None, None, :]
        if out.shape[-1] == x.shape[-1]:
            out = out + x
        x = out
    return x


if __name__ == "__main__":
    # Small shapes consistent with the module's forward.
    B, T = 2, 16
    input_dim = 24            # != num_memory_units -> first layer skips residual
    num_memory_units = 32
    ffn_inner_dim = 64
    filter_size = 5
    fsmn_num_layers = 3
    shift = 1

    key = jax.random.PRNGKey(0)
    kx, kp = jax.random.split(key)
    x = jax.random.normal(kx, (B, T, input_dim), jnp.float32)
    params = init_fsmn_params(kp, filter_size, fsmn_num_layers, input_dim,
                              num_memory_units, ffn_inner_dim)

    out = fsmn_encoder_v2(x, params, filter_size=filter_size, shift=shift)
    out = jax.block_until_ready(out)

    ref = fsmn_encoder_v2_ref(x, params, filter_size=filter_size, shift=shift)
    assert out.shape == (B, T, num_memory_units)
    max_err = jnp.max(jnp.abs(out - ref))
    # bf16 MXU inputs with f32 accumulation -> slightly wider tolerance than f32.
    assert jnp.allclose(out, ref, atol=5e-2, rtol=5e-2), \
        f"max abs diff = {max_err}"

    print("KERNEL_OK")
</pallas_src>

<mosaic_0001>
module attributes {stable_mosaic.version = 11 : i64} {
  func.func @_fsmn_fused_kernel(%arg0: i32, %arg1: memref<32x128xf32, #tpu.memory_space<vmem>>, %arg2: memref<3x128x128xbf16, #tpu.memory_space<vmem>>, %arg3: memref<3x1x128xf32, #tpu.memory_space<vmem>>, %arg4: memref<3x128x128xbf16, #tpu.memory_space<vmem>>, %arg5: memref<3x5x128xf32, #tpu.memory_space<vmem>>, %arg6: memref<32x128xf32, #tpu.memory_space<vmem>>) attributes {dimension_semantics = [#tpu.dimension_semantics<parallel>], iteration_bounds = array<i64: 1>, scalar_prefetch = 0 : i64, scratch_operands = 0 : i64, tpu.core_type = #tpu.core_type<tc>, window_params = [{transform_indices = @transform_0, window_bounds = array<i64: 32, 128>}, {pipeline_mode = #tpu.pipeline_mode<synchronous>, transform_indices = @transform_1, window_bounds = array<i64: 3, 128, 128>}, {pipeline_mode = #tpu.pipeline_mode<synchronous>, transform_indices = @transform_2, window_bounds = array<i64: 3, 1, 128>}, {pipeline_mode = #tpu.pipeline_mode<synchronous>, transform_indices = @transform_3, window_bounds = array<i64: 3, 128, 128>}, {pipeline_mode = #tpu.pipeline_mode<synchronous>, transform_indices = @transform_4, window_bounds = array<i64: 3, 5, 128>}, {transform_indices = @transform_5, window_bounds = array<i64: 32, 128>}]} {
    %0 = tpu.iota {dimensions = array<i32: 0>} : vector<32x128xi32>
    %c16_i32 = arith.constant 16 : i32
    %c0_i32 = arith.constant 0 : i32
    %1 = arith.cmpi eq, %c16_i32, %c0_i32 : i32
    %c1_i32 = arith.constant 1 : i32
    %2 = arith.select %1, %c1_i32, %c16_i32 : i32
    %3 = vector.broadcast %2 : i32 to vector<32x128xi32>
    %4 = arith.remsi %0, %3 : vector<32x128xi32>
    %c0_i32_0 = arith.constant 0 : i32
    %5 = vector.broadcast %c0_i32_0 : i32 to vector<32x128xi32>
    %6 = arith.cmpi ne, %4, %5 : vector<32x128xi32>
    %c0_i32_1 = arith.constant 0 : i32
    %7 = vector.broadcast %c0_i32_1 : i32 to vector<32x128xi32>
    %8 = arith.cmpi slt, %4, %7 : vector<32x128xi32>
    %c0_i32_2 = arith.constant 0 : i32
    %9 = arith.cmpi slt, %2, %c0_i32_2 : i32
    %10 = vector.broadcast %9 : i1 to vector<32x128xi1>
    %11 = vector.broadcast %10 : vector<32x128xi1> to vector<32x128xi1>
    %12 = arith.xori %8, %11 : vector<32x128xi1>
    %13 = arith.andi %12, %6 : vector<32x128xi1>
    %14 = vector.broadcast %2 : i32 to vector<32x128xi32>
    %15 = arith.addi %4, %14 : vector<32x128xi32>
    %16 = arith.select %13, %15, %4 : vector<32x128xi1>, vector<32x128xi32>
    %c0 = arith.constant 0 : index
    %c0_3 = arith.constant 0 : index
    %17 = vector.load %arg1[%c0, %c0_3] : memref<32x128xf32, #tpu.memory_space<vmem>>, vector<32x128xf32>
    %18 = arith.truncf %17 : vector<32x128xf32> to vector<32x128xbf16>
    %c0_4 = arith.constant 0 : index
    %c0_5 = arith.constant 0 : index
    %c0_6 = arith.constant 0 : index
    %19 = vector.load %arg2[%c0_4, %c0_5, %c0_6] : memref<3x128x128xbf16, #tpu.memory_space<vmem>>, vector<1x128x128xbf16>
    %20 = vector.shape_cast %19 : vector<1x128x128xbf16> to vector<128x128xbf16>
    %cst = arith.constant dense<0.000000e+00> : vector<32x128xf32>
    %21 = tpu.matmul %18, %20, %cst {dimension_numbers = #tpu.dot_dimension_numbers<[1], [0], [0], [1], [0, 0, 1, 1], [], []>} : vector<32x128xbf16>, vector<128x128xbf16>, vector<32x128xf32> -> vector<32x128xf32>
    %c0_7 = arith.constant 0 : index
    %c0_8 = arith.constant 0 : index
    %c0_9 = arith.constant 0 : index
    %22 = vector.load %arg3[%c0_7, %c0_8, %c0_9] : memref<3x1x128xf32, #tpu.memory_space<vmem>>, vector<1x1x128xf32>
    %23 = vector.shape_cast %22 : vector<1x1x128xf32> to vector<1x128xf32>
    %24 = vector.broadcast %23 : vector<1x128xf32> to vector<32x128xf32>
    %25 = arith.addf %21, %24 : vector<32x128xf32>
    %cst_10 = arith.constant 0.000000e+00 : f32
    %26 = vector.broadcast %cst_10 : f32 to vector<32x128xf32>
    %27 = arith.maximumf %25, %26 : vector<32x128xf32>
    %28 = arith.truncf %27 : vector<32x128xf32> to vector<32x128xbf16>
    %c0_11 = arith.constant 0 : index
    %c0_12 = arith.constant 0 : index
    %c0_13 = arith.constant 0 : index
    %29 = vector.load %arg4[%c0_11, %c0_12, %c0_13] : memref<3x128x128xbf16, #tpu.memory_space<vmem>>, vector<1x128x128xbf16>
    %30 = vector.shape_cast %29 : vector<1x128x128xbf16> to vector<128x128xbf16>
    %cst_14 = arith.constant dense<0.000000e+00> : vector<32x128xf32>
    %31 = tpu.matmul %28, %30, %cst_14 {dimension_numbers = #tpu.dot_dimension_numbers<[1], [0], [0], [1], [0, 0, 1, 1], [], []>} : vector<32x128xbf16>, vector<128x128xbf16>, vector<32x128xf32> -> vector<32x128xf32>
    %c0_15 = arith.constant 0 : index
    %c0_16 = arith.constant 0 : index
    %c0_17 = arith.constant 0 : index
    %32 = vector.load %arg5[%c0_15, %c0_16, %c0_17] : memref<3x5x128xf32, #tpu.memory_space<vmem>>, vector<1x1x128xf32>
    %33 = vector.shape_cast %32 : vector<1x1x128xf32> to vector<1x128xf32>
    %c3_i32 = arith.constant 3 : i32
    %34 = tpu.dynamic_rotate %31 by %c3_i32 dim 0 : vector<32x128xf32>, i32 -> vector<32x128xf32>
    %c3_i32_18 = arith.constant 3 : i32
    %35 = vector.broadcast %c3_i32_18 : i32 to vector<32x128xi32>
    %36 = arith.cmpi sge, %16, %35 : vector<32x128xi32>
    %c19_i32 = arith.constant 19 : i32
    %37 = vector.broadcast %c19_i32 : i32 to vector<32x128xi32>
    %38 = arith.cmpi slt, %16, %37 : vector<32x128xi32>
    %39 = arith.andi %36, %38 : vector<32x128xi1>
    %cst_19 = arith.constant 0.000000e+00 : f32
    %40 = vector.broadcast %cst_19 : f32 to vector<32x128xf32>
    %41 = arith.select %39, %34, %40 : vector<32x128xi1>, vector<32x128xf32>
    %42 = vector.broadcast %33 : vector<1x128xf32> to vector<32x128xf32>
    %43 = arith.mulf %41, %42 : vector<32x128xf32>
    %44 = arith.addf %31, %43 : vector<32x128xf32>
    %c0_20 = arith.constant 0 : index
    %c1 = arith.constant 1 : index
    %c0_21 = arith.constant 0 : index
    %45 = vector.load %arg5[%c0_20, %c1, %c0_21] : memref<3x5x128xf32, #tpu.memory_space<vmem>>, vector<1x1x128xf32>
    %46 = vector.shape_cast %45 : vector<1x1x128xf32> to vector<1x128xf32>
    %c2_i32 = arith.constant 2 : i32
    %47 = tpu.dynamic_rotate %31 by %c2_i32 dim 0 : vector<32x128xf32>, i32 -> vector<32x128xf32>
    %c2_i32_22 = arith.constant 2 : i32
    %48 = vector.broadcast %c2_i32_22 : i32 to vector<32x128xi32>
    %49 = arith.cmpi sge, %16, %48 : vector<32x128xi32>
    %c18_i32 = arith.constant 18 : i32
    %50 = vector.broadcast %c18_i32 : i32 to vector<32x128xi32>
    %51 = arith.cmpi slt, %16, %50 : vector<32x128xi32>
    %52 = arith.andi %49, %51 : vector<32x128xi1>
    %cst_23 = arith.constant 0.000000e+00 : f32
    %53 = vector.broadcast %cst_23 : f32 to vector<32x128xf32>
    %54 = arith.select %52, %47, %53 : vector<32x128xi1>, vector<32x128xf32>
    %55 = vector.broadcast %46 : vector<1x128xf32> to vector<32x128xf32>
    %56 = arith.mulf %54, %55 : vector<32x128xf32>
    %57 = arith.addf %44, %56 : vector<32x128xf32>
    %c0_24 = arith.constant 0 : index
    %c2 = arith.constant 2 : index
    %c0_25 = arith.constant 0 : index
    %58 = vector.load %arg5[%c0_24, %c2, %c0_25] : memref<3x5x128xf32, #tpu.memory_space<vmem>>, vector<1x1x128xf32>
    %59 = vector.shape_cast %58 : vector<1x1x128xf32> to vector<1x128xf32>
    %c1_i32_26 = arith.constant 1 : i32
    %60 = tpu.dynamic_rotate %31 by %c1_i32_26 dim 0 : vector<32x128xf32>, i32 -> vector<32x128xf32>
    %c1_i32_27 = arith.constant 1 : i32
    %61 = vector.broadcast %c1_i32_27 : i32 to vector<32x128xi32>
    %62 = arith.cmpi sge, %16, %61 : vector<32x128xi32>
    %c17_i32 = arith.constant 17 : i32
    %63 = vector.broadcast %c17_i32 : i32 to vector<32x128xi32>
    %64 = arith.cmpi slt, %16, %63 : vector<32x128xi32>
    %65 = arith.andi %62, %64 : vector<32x128xi1>
    %cst_28 = arith.constant 0.000000e+00 : f32
    %66 = vector.broadcast %cst_28 : f32 to vector<32x128xf32>
    %67 = arith.select %65, %60, %66 : vector<32x128xi1>, vector<32x128xf32>
    %68 = vector.broadcast %59 : vector<1x128xf32> to vector<32x128xf32>
    %69 = arith.mulf %67, %68 : vector<32x128xf32>
    %70 = arith.addf %57, %69 : vector<32x128xf32>
    %c0_29 = arith.constant 0 : index
    %c3 = arith.constant 3 : index
    %c0_30 = arith.constant 0 : index
    %71 = vector.load %arg5[%c0_29, %c3, %c0_30] : memref<3x5x128xf32, #tpu.memory_space<vmem>>, vector<1x1x128xf32>
    %72 = vector.shape_cast %71 : vector<1x1x128xf32> to vector<1x128xf32>
    %73 = vector.broadcast %72 : vector<1x128xf32> to vector<32x128xf32>
    %74 = arith.mulf %31, %73 : vector<32x128xf32>
    %75 = arith.addf %70, %74 : vector<32x128xf32>
    %c0_31 = arith.constant 0 : index
    %c4 = arith.constant 4 : index
    %c0_32 = arith.constant 0 : index
    %76 = vector.load %arg5[%c0_31, %c4, %c0_32] : memref<3x5x128xf32, #tpu.memory_space<vmem>>, vector<1x1x128xf32>
    %77 = vector.shape_cast %76 : vector<1x1x128xf32> to vector<1x128xf32>
    %c31_i32 = arith.constant 31 : i32
    %78 = tpu.dynamic_rotate %31 by %c31_i32 dim 0 : vector<32x128xf32>, i32 -> vector<32x128xf32>
    %c-1_i32 = arith.constant -1 : i32
    %79 = vector.broadcast %c-1_i32 : i32 to vector<32x128xi32>
    %80 = arith.cmpi sge, %16, %79 : vector<32x128xi32>
    %c15_i32 = arith.constant 15 : i32
    %81 = vector.broadcast %c15_i32 : i32 to vector<32x128xi32>
    %82 = arith.cmpi slt, %16, %81 : vector<32x128xi32>
    %83 = arith.andi %80, %82 : vector<32x128xi1>
    %cst_33 = arith.constant 0.000000e+00 : f32
    %84 = vector.broadcast %cst_33 : f32 to vector<32x128xf32>
    %85 = arith.select %83, %78, %84 : vector<32x128xi1>, vector<32x128xf32>
    %86 = vector.broadcast %77 : vector<1x128xf32> to vector<32x128xf32>
    %87 = arith.mulf %85, %86 : vector<32x128xf32>
    %88 = arith.addf %75, %87 : vector<32x128xf32>
    %89 = arith.truncf %88 : vector<32x128xf32> to vector<32x128xbf16>
    %c1_34 = arith.constant 1 : index
    %c0_35 = arith.constant 0 : index
    %c0_36 = arith.constant 0 : index
    %90 = vector.load %arg2[%c1_34, %c0_35, %c0_36] : memref<3x128x128xbf16, #tpu.memory_space<vmem>>, vector<1x128x128xbf16>
    %91 = vector.shape_cast %90 : vector<1x128x128xbf16> to vector<128x128xbf16>
    %cst_37 = arith.constant dense<0.000000e+00> : vector<32x128xf32>
    %92 = tpu.matmul %89, %91, %cst_37 {dimension_numbers = #tpu.dot_dimension_numbers<[1], [0], [0], [1], [0, 0, 1, 1], [], []>} : vector<32x128xbf16>, vector<128x128xbf16>, vector<32x128xf32> -> vector<32x128xf32>
    %c1_38 = arith.constant 1 : index
    %c0_39 = arith.constant 0 : index
    %c0_40 = arith.constant 0 : index
    %93 = vector.load %arg3[%c1_38, %c0_39, %c0_40] : memref<3x1x128xf32, #tpu.memory_space<vmem>>, vector<1x1x128xf32>
    %94 = vector.shape_cast %93 : vector<1x1x128xf32> to vector<1x128xf32>
    %95 = vector.broadcast %94 : vector<1x128xf32> to vector<32x128xf32>
    %96 = arith.addf %92, %95 : vector<32x128xf32>
    %cst_41 = arith.constant 0.000000e+00 : f32
    %97 = vector.broadcast %cst_41 : f32 to vector<32x128xf32>
    %98 = arith.maximumf %96, %97 : vector<32x128xf32>
    %99 = arith.truncf %98 : vector<32x128xf32> to vector<32x128xbf16>
    %c1_42 = arith.constant 1 : index
    %c0_43 = arith.constant 0 : index
    %c0_44 = arith.constant 0 : index
    %100 = vector.load %arg4[%c1_42, %c0_43, %c0_44] : memref<3x128x128xbf16, #tpu.memory_space<vmem>>, vector<1x128x128xbf16>
    %101 = vector.shape_cast %100 : vector<1x128x128xbf16> to vector<128x128xbf16>
    %cst_45 = arith.constant dense<0.000000e+00> : vector<32x128xf32>
    %102 = tpu.matmul %99, %101, %cst_45 {dimension_numbers = #tpu.dot_dimension_numbers<[1], [0], [0], [1], [0, 0, 1, 1], [], []>} : vector<32x128xbf16>, vector<128x128xbf16>, vector<32x128xf32> -> vector<32x128xf32>
    %c1_46 = arith.constant 1 : index
    %c0_47 = arith.constant 0 : index
    %c0_48 = arith.constant 0 : index
    %103 = vector.load %arg5[%c1_46, %c0_47, %c0_48] : memref<3x5x128xf32, #tpu.memory_space<vmem>>, vector<1x1x128xf32>
    %104 = vector.shape_cast %103 : vector<1x1x128xf32> to vector<1x128xf32>
    %c3_i32_49 = arith.constant 3 : i32
    %105 = tpu.dynamic_rotate %102 by %c3_i32_49 dim 0 : vector<32x128xf32>, i32 -> vector<32x128xf32>
    %c3_i32_50 = arith.constant 3 : i32
    %106 = vector.broadcast %c3_i32_50 : i32 to vector<32x128xi32>
    %107 = arith.cmpi sge, %16, %106 : vector<32x128xi32>
    %c19_i32_51 = arith.constant 19 : i32
    %108 = vector.broadcast %c19_i32_51 : i32 to vector<32x128xi32>
    %109 = arith.cmpi slt, %16, %108 : vector<32x128xi32>
    %110 = arith.andi %107, %109 : vector<32x128xi1>
    %cst_52 = arith.constant 0.000000e+00 : f32
    %111 = vector.broadcast %cst_52 : f32 to vector<32x128xf32>
    %112 = arith.select %110, %105, %111 : vector<32x128xi1>, vector<32x128xf32>
    %113 = vector.broadcast %104 : vector<1x128xf32> to vector<32x128xf32>
    %114 = arith.mulf %112, %113 : vector<32x128xf32>
    %115 = arith.addf %102, %114 : vector<32x128xf32>
    %c1_53 = arith.constant 1 : index
    %c1_54 = arith.constant 1 : index
    %c0_55 = arith.constant 0 : index
    %116 = vector.load %arg5[%c1_53, %c1_54, %c0_55] : memref<3x5x128xf32, #tpu.memory_space<vmem>>, vector<1x1x128xf32>
    %117 = vector.shape_cast %116 : vector<1x1x128xf32> to vector<1x128xf32>
    %c2_i32_56 = arith.constant 2 : i32
    %118 = tpu.dynamic_rotate %102 by %c2_i32_56 dim 0 : vector<32x128xf32>, i32 -> vector<32x128xf32>
    %c2_i32_57 = arith.constant 2 : i32
    %119 = vector.broadcast %c2_i32_57 : i32 to vector<32x128xi32>
    %120 = arith.cmpi sge, %16, %119 : vector<32x128xi32>
    %c18_i32_58 = arith.constant 18 : i32
    %121 = vector.broadcast %c18_i32_58 : i32 to vector<32x128xi32>
    %122 = arith.cmpi slt, %16, %121 : vector<32x128xi32>
    %123 = arith.andi %120, %122 : vector<32x128xi1>
    %cst_59 = arith.constant 0.000000e+00 : f32
    %124 = vector.broadcast %cst_59 : f32 to vector<32x128xf32>
    %125 = arith.select %123, %118, %124 : vector<32x128xi1>, vector<32x128xf32>
    %126 = vector.broadcast %117 : vector<1x128xf32> to vector<32x128xf32>
    %127 = arith.mulf %125, %126 : vector<32x128xf32>
    %128 = arith.addf %115, %127 : vector<32x128xf32>
    %c1_60 = arith.constant 1 : index
    %c2_61 = arith.constant 2 : index
    %c0_62 = arith.constant 0 : index
    %129 = vector.load %arg5[%c1_60, %c2_61, %c0_62] : memref<3x5x128xf32, #tpu.memory_space<vmem>>, vector<1x1x128xf32>
    %130 = vector.shape_cast %129 : vector<1x1x128xf32> to vector<1x128xf32>
    %c1_i32_63 = arith.constant 1 : i32
    %131 = tpu.dynamic_rotate %102 by %c1_i32_63 dim 0 : vector<32x128xf32>, i32 -> vector<32x128xf32>
    %c1_i32_64 = arith.constant 1 : i32
    %132 = vector.broadcast %c1_i32_64 : i32 to vector<32x128xi32>
    %133 = arith.cmpi sge, %16, %132 : vector<32x128xi32>
    %c17_i32_65 = arith.constant 17 : i32
    %134 = vector.broadcast %c17_i32_65 : i32 to vector<32x128xi32>
    %135 = arith.cmpi slt, %16, %134 : vector<32x128xi32>
    %136 = arith.andi %133, %135 : vector<32x128xi1>
    %cst_66 = arith.constant 0.000000e+00 : f32
    %137 = vector.broadcast %cst_66 : f32 to vector<32x128xf32>
    %138 = arith.select %136, %131, %137 : vector<32x128xi1>, vector<32x128xf32>
    %139 = vector.broadcast %130 : vector<1x128xf32> to vector<32x128xf32>
    %140 = arith.mulf %138, %139 : vector<32x128xf32>
    %141 = arith.addf %128, %140 : vector<32x128xf32>
    %c1_67 = arith.constant 1 : index
    %c3_68 = arith.constant 3 : index
    %c0_69 = arith.constant 0 : index
    %142 = vector.load %arg5[%c1_67, %c3_68, %c0_69] : memref<3x5x128xf32, #tpu.memory_space<vmem>>, vector<1x1x128xf32>
    %143 = vector.shape_cast %142 : vector<1x1x128xf32> to vector<1x128xf32>
    %144 = vector.broadcast %143 : vector<1x128xf32> to vector<32x128xf32>
    %145 = arith.mulf %102, %144 : vector<32x128xf32>
    %146 = arith.addf %141, %145 : vector<32x128xf32>
    %c1_70 = arith.constant 1 : index
    %c4_71 = arith.constant 4 : index
    %c0_72 = arith.constant 0 : index
    %147 = vector.load %arg5[%c1_70, %c4_71, %c0_72] : memref<3x5x128xf32, #tpu.memory_space<vmem>>, vector<1x1x128xf32>
    %148 = vector.shape_cast %147 : vector<1x1x128xf32> to vector<1x128xf32>
    %c31_i32_73 = arith.constant 31 : i32
    %149 = tpu.dynamic_rotate %102 by %c31_i32_73 dim 0 : vector<32x128xf32>, i32 -> vector<32x128xf32>
    %c-1_i32_74 = arith.constant -1 : i32
    %150 = vector.broadcast %c-1_i32_74 : i32 to vector<32x128xi32>
    %151 = arith.cmpi sge, %16, %150 : vector<32x128xi32>
    %c15_i32_75 = arith.constant 15 : i32
    %152 = vector.broadcast %c15_i32_75 : i32 to vector<32x128xi32>
    %153 = arith.cmpi slt, %16, %152 : vector<32x128xi32>
    %154 = arith.andi %151, %153 : vector<32x128xi1>
    %cst_76 = arith.constant 0.000000e+00 : f32
    %155 = vector.broadcast %cst_76 : f32 to vector<32x128xf32>
    %156 = arith.select %154, %149, %155 : vector<32x128xi1>, vector<32x128xf32>
    %157 = vector.broadcast %148 : vector<1x128xf32> to vector<32x128xf32>
    %158 = arith.mulf %156, %157 : vector<32x128xf32>
    %159 = arith.addf %146, %158 : vector<32x128xf32>
    %160 = arith.addf %159, %88 : vector<32x128xf32>
    %161 = arith.truncf %160 : vector<32x128xf32> to vector<32x128xbf16>
    %c2_77 = arith.constant 2 : index
    %c0_78 = arith.constant 0 : index
    %c0_79 = arith.constant 0 : index
    %162 = vector.load %arg2[%c2_77, %c0_78, %c0_79] : memref<3x128x128xbf16, #tpu.memory_space<vmem>>, vector<1x128x128xbf16>
    %163 = vector.shape_cast %162 : vector<1x128x128xbf16> to vector<128x128xbf16>
    %cst_80 = arith.constant dense<0.000000e+00> : vector<32x128xf32>
    %164 = tpu.matmul %161, %163, %cst_80 {dimension_numbers = #tpu.dot_dimension_numbers<[1], [0], [0], [1], [0, 0, 1, 1], [], []>} : vector<32x128xbf16>, vector<128x128xbf16>, vector<32x128xf32> -> vector<32x128xf32>
    %c2_81 = arith.constant 2 : index
    %c0_82 = arith.constant 0 : index
    %c0_83 = arith.constant 0 : index
    %165 = vector.load %arg3[%c2_81, %c0_82, %c0_83] : memref<3x1x128xf32, #tpu.memory_space<vmem>>, vector<1x1x128xf32>
    %166 = vector.shape_cast %165 : vector<1x1x128xf32> to vector<1x128xf32>
    %167 = vector.broadcast %166 : vector<1x128xf32> to vector<32x128xf32>
    %168 = arith.addf %164, %167 : vector<32x128xf32>
    %cst_84 = arith.constant 0.000000e+00 : f32
    %169 = vector.broadcast %cst_84 : f32 to vector<32x128xf32>
    %170 = arith.maximumf %168, %169 : vector<32x128xf32>
    %171 = arith.truncf %170 : vector<32x128xf32> to vector<32x128xbf16>
    %c2_85 = arith.constant 2 : index
    %c0_86 = arith.constant 0 : index
    %c0_87 = arith.constant 0 : index
    %172 = vector.load %arg4[%c2_85, %c0_86, %c0_87] : memref<3x128x128xbf16, #tpu.memory_space<vmem>>, vector<1x128x128xbf16>
    %173 = vector.shape_cast %172 : vector<1x128x128xbf16> to vector<128x128xbf16>
    %cst_88 = arith.constant dense<0.000000e+00> : vector<32x128xf32>
    %174 = tpu.matmul %171, %173, %cst_88 {dimension_numbers = #tpu.dot_dimension_numbers<[1], [0], [0], [1], [0, 0, 1, 1], [], []>} : vector<32x128xbf16>, vector<128x128xbf16>, vector<32x128xf32> -> vector<32x128xf32>
    %c2_89 = arith.constant 2 : index
    %c0_90 = arith.constant 0 : index
    %c0_91 = arith.constant 0 : index
    %175 = vector.load %arg5[%c2_89, %c0_90, %c0_91] : memref<3x5x128xf32, #tpu.memory_space<vmem>>, vector<1x1x128xf32>
    %176 = vector.shape_cast %175 : vector<1x1x128xf32> to vector<1x128xf32>
    %c3_i32_92 = arith.constant 3 : i32
    %177 = tpu.dynamic_rotate %174 by %c3_i32_92 dim 0 : vector<32x128xf32>, i32 -> vector<32x128xf32>
    %c3_i32_93 = arith.constant 3 : i32
    %178 = vector.broadcast %c3_i32_93 : i32 to vector<32x128xi32>
    %179 = arith.cmpi sge, %16, %178 : vector<32x128xi32>
    %c19_i32_94 = arith.constant 19 : i32
    %180 = vector.broadcast %c19_i32_94 : i32 to vector<32x128xi32>
    %181 = arith.cmpi slt, %16, %180 : vector<32x128xi32>
    %182 = arith.andi %179, %181 : vector<32x128xi1>
    %cst_95 = arith.constant 0.000000e+00 : f32
    %183 = vector.broadcast %cst_95 : f32 to vector<32x128xf32>
    %184 = arith.select %182, %177, %183 : vector<32x128xi1>, vector<32x128xf32>
    %185 = vector.broadcast %176 : vector<1x128xf32> to vector<32x128xf32>
    %186 = arith.mulf %184, %185 : vector<32x128xf32>
    %187 = arith.addf %174, %186 : vector<32x128xf32>
    %c2_96 = arith.constant 2 : index
    %c1_97 = arith.constant 1 : index
    %c0_98 = arith.constant 0 : index
    %188 = vector.load %arg5[%c2_96, %c1_97, %c0_98] : memref<3x5x128xf32, #tpu.memory_space<vmem>>, vector<1x1x128xf32>
    %189 = vector.shape_cast %188 : vector<1x1x128xf32> to vector<1x128xf32>
    %c2_i32_99 = arith.constant 2 : i32
    %190 = tpu.dynamic_rotate %174 by %c2_i32_99 dim 0 : vector<32x128xf32>, i32 -> vector<32x128xf32>
    %c2_i32_100 = arith.constant 2 : i32
    %191 = vector.broadcast %c2_i32_100 : i32 to vector<32x128xi32>
    %192 = arith.cmpi sge, %16, %191 : vector<32x128xi32>
    %c18_i32_101 = arith.constant 18 : i32
    %193 = vector.broadcast %c18_i32_101 : i32 to vector<32x128xi32>
    %194 = arith.cmpi slt, %16, %193 : vector<32x128xi32>
    %195 = arith.andi %192, %194 : vector<32x128xi1>
    %cst_102 = arith.constant 0.000000e+00 : f32
    %196 = vector.broadcast %cst_102 : f32 to vector<32x128xf32>
    %197 = arith.select %195, %190, %196 : vector<32x128xi1>, vector<32x128xf32>
    %198 = vector.broadcast %189 : vector<1x128xf32> to vector<32x128xf32>
    %199 = arith.mulf %197, %198 : vector<32x128xf32>
    %200 = arith.addf %187, %199 : vector<32x128xf32>
    %c2_103 = arith.constant 2 : index
    %c2_104 = arith.constant 2 : index
    %c0_105 = arith.constant 0 : index
    %201 = vector.load %arg5[%c2_103, %c2_104, %c0_105] : memref<3x5x128xf32, #tpu.memory_space<vmem>>, vector<1x1x128xf32>
    %202 = vector.shape_cast %201 : vector<1x1x128xf32> to vector<1x128xf32>
    %c1_i32_106 = arith.constant 1 : i32
    %203 = tpu.dynamic_rotate %174 by %c1_i32_106 dim 0 : vector<32x128xf32>, i32 -> vector<32x128xf32>
    %c1_i32_107 = arith.constant 1 : i32
    %204 = vector.broadcast %c1_i32_107 : i32 to vector<32x128xi32>
    %205 = arith.cmpi sge, %16, %204 : vector<32x128xi32>
    %c17_i32_108 = arith.constant 17 : i32
    %206 = vector.broadcast %c17_i32_108 : i32 to vector<32x128xi32>
    %207 = arith.cmpi slt, %16, %206 : vector<32x128xi32>
    %208 = arith.andi %205, %207 : vector<32x128xi1>
    %cst_109 = arith.constant 0.000000e+00 : f32
    %209 = vector.broadcast %cst_109 : f32 to vector<32x128xf32>
    %210 = arith.select %208, %203, %209 : vector<32x128xi1>, vector<32x128xf32>
    %211 = vector.broadcast %202 : vector<1x128xf32> to vector<32x128xf32>
    %212 = arith.mulf %210, %211 : vector<32x128xf32>
    %213 = arith.addf %200, %212 : vector<32x128xf32>
    %c2_110 = arith.constant 2 : index
    %c3_111 = arith.constant 3 : index
    %c0_112 = arith.constant 0 : index
    %214 = vector.load %arg5[%c2_110, %c3_111, %c0_112] : memref<3x5x128xf32, #tpu.memory_space<vmem>>, vector<1x1x128xf32>
    %215 = vector.shape_cast %214 : vector<1x1x128xf32> to vector<1x128xf32>
    %216 = vector.broadcast %215 : vector<1x128xf32> to vector<32x128xf32>
    %217 = arith.mulf %174, %216 : vector<32x128xf32>
    %218 = arith.addf %213, %217 : vector<32x128xf32>
    %c2_113 = arith.constant 2 : index
    %c4_114 = arith.constant 4 : index
    %c0_115 = arith.constant 0 : index
    %219 = vector.load %arg5[%c2_113, %c4_114, %c0_115] : memref<3x5x128xf32, #tpu.memory_space<vmem>>, vector<1x1x128xf32>
    %220 = vector.shape_cast %219 : vector<1x1x128xf32> to vector<1x128xf32>
    %c31_i32_116 = arith.constant 31 : i32
    %221 = tpu.dynamic_rotate %174 by %c31_i32_116 dim 0 : vector<32x128xf32>, i32 -> vector<32x128xf32>
    %c-1_i32_117 = arith.constant -1 : i32
    %222 = vector.broadcast %c-1_i32_117 : i32 to vector<32x128xi32>
    %223 = arith.cmpi sge, %16, %222 : vector<32x128xi32>
    %c15_i32_118 = arith.constant 15 : i32
    %224 = vector.broadcast %c15_i32_118 : i32 to vector<32x128xi32>
    %225 = arith.cmpi slt, %16, %224 : vector<32x128xi32>
    %226 = arith.andi %223, %225 : vector<32x128xi1>
    %cst_119 = arith.constant 0.000000e+00 : f32
    %227 = vector.broadcast %cst_119 : f32 to vector<32x128xf32>
    %228 = arith.select %226, %221, %227 : vector<32x128xi1>, vector<32x128xf32>
    %229 = vector.broadcast %220 : vector<1x128xf32> to vector<32x128xf32>
    %230 = arith.mulf %228, %229 : vector<32x128xf32>
    %231 = arith.addf %218, %230 : vector<32x128xf32>
    %232 = arith.addf %231, %160 : vector<32x128xf32>
    %c0_120 = arith.constant 0 : index
    %c0_121 = arith.constant 0 : index
    %233 = vector.load %arg6[%c0_120, %c0_121] : memref<32x128xf32, #tpu.memory_space<vmem>>, vector<32x128xf32>
    tpu.vector_store %arg6[%c0_120, %c0_121], %232 {strides = array<i32>} : memref<32x128xf32, #tpu.memory_space<vmem>>, vector<32x128xf32>,
    return
  }
  func.func @transform_0(%arg0: i32) -> (i32, i32) {
    %c0_i32 = arith.constant 0 : i32
    %c0_i32_0 = arith.constant 0 : i32
    return %arg0, %c0_i32 : i32, i32
  }
  func.func @transform_1(%arg0: i32) -> (i32, i32, i32) {
    %c0_i32 = arith.constant 0 : i32
    %c0_i32_0 = arith.constant 0 : i32
    %c0_i32_1 = arith.constant 0 : i32
    %c0_i32_2 = arith.constant 0 : i32
    return %c0_i32, %c0_i32_0, %c0_i32_1 : i32, i32, i32
  }
  func.func @transform_2(%arg0: i32) -> (i32, i32, i32) {
    %c0_i32 = arith.constant 0 : i32
    %c0_i32_0 = arith.constant 0 : i32
    %c0_i32_1 = arith.constant 0 : i32
    %c0_i32_2 = arith.constant 0 : i32
    return %c0_i32, %c0_i32_0, %c0_i32_1 : i32, i32, i32
  }
  func.func @transform_3(%arg0: i32) -> (i32, i32, i32) {
    %c0_i32 = arith.constant 0 : i32
    %c0_i32_0 = arith.constant 0 : i32
    %c0_i32_1 = arith.constant 0 : i32
    %c0_i32_2 = arith.constant 0 : i32
    return %c0_i32, %c0_i32_0, %c0_i32_1 : i32, i32, i32
  }
  func.func @transform_4(%arg0: i32) -> (i32, i32, i32) {
    %c0_i32 = arith.constant 0 : i32
    %c0_i32_0 = arith.constant 0 : i32
    %c0_i32_1 = arith.constant 0 : i32
    %c0_i32_2 = arith.constant 0 : i32
    return %c0_i32, %c0_i32_0, %c0_i32_1 : i32, i32, i32
  }
  func.func @transform_5(%arg0: i32) -> (i32, i32) {
    %c0_i32 = arith.constant 0 : i32
    %c0_i32_0 = arith.constant 0 : i32
    return %arg0, %c0_i32 : i32, i32
  }
}

</mosaic_0001>

<llo_original>
// kernel: tpu_custom_call.1
$region0: #{tpu_custom_call.1}
  #allocation0 [shape = 'u32[]', space=smem, size = 0x4, offset = 0x4, fixed_abs, tag = 'smem constant byte address 0x4 - core index']
  #allocation1 [shape = 'u32[72,128]{1,0:T(1,128)}', space=vmem, size = 0x9000, scoped, tag = 'internal scratch']
  %s0 = inlined_call_operand.vmem [shape: f32[32,128], index: 0, kind: input, shape index: {}]
  %s1 = inlined_call_operand.hbm [shape: bf16[3,128,128], index: 1, kind: input, shape index: {}]
  %s2 = inlined_call_operand.vmem [shape: f32[3,1,128], index: 2, kind: input, shape index: {}]
  %s3 = inlined_call_operand.hbm [shape: bf16[3,128,128], index: 3, kind: input, shape index: {}]
  %s4 = inlined_call_operand.vmem [shape: f32[3,5,128], index: 4, kind: input, shape index: {}]
  %s5 = inlined_call_operand.hbm [shape: f32[32,128], index: 5, kind: output, shape index: {}]
  %s6 = sld [smem:[#allocation0]]
  $region38: #{tpu_custom_call.1} parent=0
    _
  %s8 = ssub.s32 1, %s6
  %s9 = scalar_select 0, %s8, %s6
  $region1: #{tpu_custom_call.1} parent=0
    #allocation2 [shape = 'u8[98304]{0}', space=vmem, size = 0x18000, scoped, tag = 'input window, operand 1, single buffered']
    #allocation3 [shape = 's32[1]{0}', space=sflag, size = 0x4, scoped, tag = 'scoped memory for tpu_custom_call.1']
    #allocation4 [shape = 's32[1]{0}', space=sflag, size = 0x4, scoped, tag = 'scoped memory for tpu_custom_call.1']
    #allocation5 [shape = 'u8[98304]{0}', space=vmem, size = 0x18000, scoped, tag = 'input window, operand 3, single buffered']
    #allocation6 [shape = 's32[1]{0}', space=sflag, size = 0x4, scoped, tag = 'scoped memory for tpu_custom_call.1']
    #allocation7 [shape = 'u8[16384]{0}', space=vmem, size = 0x4000, scoped, tag = 'output window, operand 0, single buffered']
    %10 = vsyncpa [#allocation3], 0
    %11 = vsyncpa [#allocation6], 0
    %12 = vsyncpa [#allocation4], 0
    // Predicated region
    $region2: #{tpu_custom_call.1} parent=1 // pred_check
      _
    $region3: #{tpu_custom_call.1} parent=1 // pred_check_branch
      %14 = sbr.rel (0) target = $region5
    $region4: #{tpu_custom_call.1} parent=1 // pred_region
      _
    $region5: #{tpu_custom_call.1} parent=1 // pred_fallthru
      _
    // Predicated region
    $region6: #{tpu_custom_call.1} parent=1 // pred_check
      _
    $region7: #{tpu_custom_call.1} parent=1 // pred_check_branch
      %16 = sbr.rel (0) target = $region9
    $region8: #{tpu_custom_call.1} parent=1 // pred_region
      %18 = vsyncadd [#allocation3], 0
      %s19 = sshll.u32 %s1, 4
      %s20 = int_to_ptr.hbm [resolvable:$true] %s19
      %s21 = sshll.u32 [#allocation2], 4
      %s22 = int_to_ptr.vmem [resolvable:$true] %s21
      %27 = dma.hbm_to_vmem [thread:$0]  %s20, 3072, %s22, [#allocation3], 64, 64, 4
    $region9: #{tpu_custom_call.1} parent=1 // pred_fallthru
      _
    // Predicated region
    $region10: #{tpu_custom_call.1} parent=1 // pred_check
      _
    $region11: #{tpu_custom_call.1} parent=1 // pred_check_branch
      %29 = sbr.rel (0) target = $region13
    $region12: #{tpu_custom_call.1} parent=1 // pred_region
      _
    $region13: #{tpu_custom_call.1} parent=1 // pred_fallthru
      _
    // Predicated region
    $region14: #{tpu_custom_call.1} parent=1 // pred_check
      _
    $region15: #{tpu_custom_call.1} parent=1 // pred_check_branch
      %31 = sbr.rel (0) target = $region17
    $region16: #{tpu_custom_call.1} parent=1 // pred_region
      %33 = vsyncadd [#allocation6], 0
      %s34 = sshll.u32 %s3, 4
      %s35 = int_to_ptr.hbm [resolvable:$true] %s34
      %s36 = sshll.u32 [#allocation5], 4
      %s37 = int_to_ptr.vmem [resolvable:$true] %s36
      %42 = dma.hbm_to_vmem [thread:$0]  %s35, 3072, %s37, [#allocation6], 64, 64, 4
    $region17: #{tpu_custom_call.1} parent=1 // pred_fallthru
      _
    // Predicated region
    $region18: #{tpu_custom_call.1} parent=1 // pred_check
      _
    $region19: #{tpu_custom_call.1} parent=1 // pred_check_branch
      %44 = sbr.rel (0) target = $region21
    $region20: #{tpu_custom_call.1} parent=1 // pred_region
      _
    $region21: #{tpu_custom_call.1} parent=1 // pred_fallthru
      _
    // Predicated region
    $region22: #{tpu_custom_call.1} parent=1 // pred_check
      _
    $region23: #{tpu_custom_call.1} parent=1 // pred_check_branch
      %46 = sbr.rel (0) target = $region25
    $region24: #{tpu_custom_call.1} parent=1 // pred_region
      %48 = dma.done [#allocation3], 3072
    $region25: #{tpu_custom_call.1} parent=1 // pred_fallthru
      _
    // Predicated region
    $region26: #{tpu_custom_call.1} parent=1 // pred_check
      _
    $region27: #{tpu_custom_call.1} parent=1 // pred_check_branch
      %50 = sbr.rel (0) target = $region29
    $region28: #{tpu_custom_call.1} parent=1 // pred_region
      %52 = dma.done [#allocation6], 3072
    $region29: #{tpu_custom_call.1} parent=1 // pred_fallthru
      _
    %v53 = vlaneseq
    %v54 = vshrl.u32 %v53, 7
    %v55 = vadd.s32 %v54, 8
    %v56 = vadd.s32 %v54, 16
    %v57 = vadd.s32 %v54, 24
    %vm58 = vcmp.lt.s32.totalorder %v54, 0
    %v59 = vsub.s32 0, %v54
    %v60 = vsel %vm58, %v59, %v54
    %v61 = vshrl.u32 %v60, 4
    %v62 = vand.u32 %v60, 15
    %v63 = vsub.s32 0, %v62
    %v64 = vsel %vm58, %v63, %v62
    %vm65 = vcmp.lt.s32.totalorder %v55, 0
    %v66 = vsub.s32 0, %v55
    %v67 = vsel %vm65, %v66, %v55
    %v68 = vshrl.u32 %v67, 4
    %v69 = vand.u32 %v67, 15
    %v70 = vsub.s32 0, %v69
    %v71 = vsel %vm65, %v70, %v69
    %vm72 = vcmp.lt.s32.totalorder %v56, 0
    %v73 = vsub.s32 0, %v56
    %v74 = vsel %vm72, %v73, %v56
    %v75 = vshrl.u32 %v74, 4
    %v76 = vand.u32 %v74, 15
    %v77 = vsub.s32 0, %v76
    %v78 = vsel %vm72, %v77, %v76
    %vm79 = vcmp.lt.s32.totalorder %v57, 0
    %v80 = vsub.s32 0, %v57
    %v81 = vsel %vm79, %v80, %v57
    %v82 = vshrl.u32 %v81, 4
    %v83 = vand.u32 %v81, 15
    %v84 = vsub.s32 0, %v83
    %v85 = vsel %vm79, %v84, %v83
    %vm86 = vcmp.ne.s32.totalorder %v64, 0
    %vm87 = vcmp.ne.s32.totalorder %v71, 0
    %vm88 = vcmp.ne.s32.totalorder %v78, 0
    %vm89 = vcmp.ne.s32.totalorder %v85, 0
    %vm90 = vcmp.lt.s32.totalorder %v64, 0
    %vm91 = vcmp.lt.s32.totalorder %v71, 0
    %vm92 = vcmp.lt.s32.totalorder %v78, 0
    %vm93 = vcmp.lt.s32.totalorder %v85, 0
    %vm94 = vmand %vm90, %vm86
    %vm95 = vmand %vm91, %vm87
    %vm96 = vmand %vm92, %vm88
    %vm97 = vmand %vm93, %vm89
    %v98 = vadd.s32 %v64, 16
    %v99 = vadd.s32 %v71, 16
    %v100 = vadd.s32 %v78, 16
    %v101 = vadd.s32 %v85, 16
    %v102 = vsel %vm94, %v98, %v64
    %v103 = vsel %vm95, %v99, %v71
    %v104 = vsel %vm96, %v100, %v78
    %v105 = vsel %vm97, %v101, %v85
    %v106 = vld [vmem:[%s0] sm:$0xff]
    %v107 = vld [vmem:[%s0 + $0x8] sm:$0xff]
    %v108 = vld [vmem:[%s0 + $0x10] sm:$0xff]
    %v109 = vld [vmem:[%s0 + $0x18] sm:$0xff]
    %v110 = vpack.c.bf16 %v107, %v106
    %v111 = vpack.c.bf16 %v109, %v108
    %v112 = vld [vmem:[#allocation2] sm:$0xf]
    %v113 = vld [vmem:[#allocation2 + $0x4] sm:$0xf]
    %v114 = vld [vmem:[#allocation2 + $0x8] sm:$0xf]
    %v115 = vld [vmem:[#allocation2 + $0xc] sm:$0xf]
    %v116 = vld [vmem:[#allocation2 + $0x10] sm:$0xf]
    %v117 = vld [vmem:[#allocation2 + $0x14] sm:$0xf]
    %v118 = vld [vmem:[#allocation2 + $0x18] sm:$0xf]
    %v119 = vld [vmem:[#allocation2 + $0x1c] sm:$0xf]
    %v120 = vld [vmem:[#allocation2 + $0x20] sm:$0xf]
    %v121 = vld [vmem:[#allocation2 + $0x24] sm:$0xf]
    %v122 = vld [vmem:[#allocation2 + $0x28] sm:$0xf]
    %v123 = vld [vmem:[#allocation2 + $0x2c] sm:$0xf]
    %v124 = vld [vmem:[#allocation2 + $0x30] sm:$0xf]
    %v125 = vld [vmem:[#allocation2 + $0x34] sm:$0xf]
    %v126 = vld [vmem:[#allocation2 + $0x38] sm:$0xf]
    %v127 = vld [vmem:[#allocation2 + $0x3c] sm:$0xf]
    %v128 = vld [vmem:[%s2] sm:$0x1]
    %v130 = vperm.slane %v128, 0
    %v148 = vunpack.c.l.b16 %v112
    %v149 = vunpack.c.l.b16 %v113
    %v150 = vunpack.c.l.b16 %v114
    %v151 = vunpack.c.l.b16 %v115
    %v152 = vunpack.c.l.b16 %v116
    %v153 = vunpack.c.l.b16 %v117
    %v154 = vunpack.c.l.b16 %v118
    %v155 = vunpack.c.l.b16 %v119
    %v156 = vunpack.c.l.b16 %v120
    %v157 = vunpack.c.l.b16 %v121
    %v158 = vunpack.c.l.b16 %v122
    %v159 = vunpack.c.l.b16 %v123
    %v160 = vunpack.c.l.b16 %v124
    %v161 = vunpack.c.l.b16 %v125
    %v162 = vunpack.c.l.b16 %v126
    %v163 = vunpack.c.l.b16 %v127
    %v164 = vpack.c.b16 %v149, %v148
    %v165 = vpack.c.b16 %v151, %v150
    %v166 = vpack.c.b16 %v153, %v152
    %v167 = vpack.c.b16 %v155, %v154
    %v168 = vpack.c.b16 %v157, %v156
    %v169 = vpack.c.b16 %v159, %v158
    %v170 = vpack.c.b16 %v161, %v160
    %v171 = vpack.c.b16 %v163, %v162
    %180 = vmatpush.bf16.msra.mxu0 %v171
    %181 = vmatpush.bf16.msra.mxu0 %v170
    %182 = vmatpush.bf16.msra.mxu0 %v169
    %183 = vmatpush.bf16.msra.mxu0 %v168
    %184 = vmatpush.bf16.msra.mxu0 %v167
    %185 = vmatpush.bf16.msra.mxu0 %v166
    %186 = vmatpush.bf16.msra.mxu0 %v165
    %187 = vmatpush.bf16.msra.mxu0 %v164
    %188 = vmatmul.bf16.gmra.mxu0 %v110
    %v189 = vpop.f32.mrf.mxu0
    %v190 = vadd.f32 %v130, %v189
    %v191 = vpop.f32.mrf.mxu0
    %v192 = vadd.f32 %v130, %v191
    %193 = vmatmul.bf16.gmra.mxu0 %v111
    %v194 = vpop.f32.mrf.mxu0
    %v195 = vadd.f32 %v130, %v194
    %v196 = vpop.f32.mrf.mxu0
    %v197 = vadd.f32 %v130, %v196
    %198 = vdwg.mxu0
    %v199 = vmax.f32 %v190, 0.0
    %v200 = vmax.f32 %v192, 0.0
    %v201 = vmax.f32 %v195, 0.0
    %v202 = vmax.f32 %v197, 0.0
    %v203 = vpack.c.bf16 %v200, %v199
    %v204 = vpack.c.bf16 %v202, %v201
    %v205 = vld [vmem:[#allocation5] sm:$0xf]
    %v206 = vld [vmem:[#allocation5 + $0x4] sm:$0xf]
    %v207 = vld [vmem:[#allocation5 + $0x8] sm:$0xf]
    %v208 = vld [vmem:[#allocation5 + $0xc] sm:$0xf]
    %v209 = vld [vmem:[#allocation5 + $0x10] sm:$0xf]
    %v210 = vld [vmem:[#allocation5 + $0x14] sm:$0xf]
    %v211 = vld [vmem:[#allocation5 + $0x18] sm:$0xf]
    %v212 = vld [vmem:[#allocation5 + $0x1c] sm:$0xf]
    %v213 = vld [vmem:[#allocation5 + $0x20] sm:$0xf]
    %v214 = vld [vmem:[#allocation5 + $0x24] sm:$0xf]
    %v215 = vld [vmem:[#allocation5 + $0x28] sm:$0xf]
    %v216 = vld [vmem:[#allocation5 + $0x2c] sm:$0xf]
    %v217 = vld [vmem:[#allocation5 + $0x30] sm:$0xf]
    %v218 = vld [vmem:[#allocation5 + $0x34] sm:$0xf]
    %v219 = vld [vmem:[#allocation5 + $0x38] sm:$0xf]
    %v220 = vld [vmem:[#allocation5 + $0x3c] sm:$0xf]
    %v237 = vunpack.c.l.b16 %v205
    %v238 = vunpack.c.l.b16 %v206
    %v239 = vunpack.c.l.b16 %v207
    %v240 = vunpack.c.l.b16 %v208
    %v241 = vunpack.c.l.b16 %v209
    %v242 = vunpack.c.l.b16 %v210
    %v243 = vunpack.c.l.b16 %v211
    %v244 = vunpack.c.l.b16 %v212
    %v245 = vunpack.c.l.b16 %v213
    %v246 = vunpack.c.l.b16 %v214
    %v247 = vunpack.c.l.b16 %v215
    %v248 = vunpack.c.l.b16 %v216
    %v249 = vunpack.c.l.b16 %v217
    %v250 = vunpack.c.l.b16 %v218
    %v251 = vunpack.c.l.b16 %v219
    %v252 = vunpack.c.l.b16 %v220
    %v253 = vpack.c.b16 %v238, %v237
    %v254 = vpack.c.b16 %v240, %v239
    %v255 = vpack.c.b16 %v242, %v241
    %v256 = vpack.c.b16 %v244, %v243
    %v257 = vpack.c.b16 %v246, %v245
    %v258 = vpack.c.b16 %v248, %v247
    %v259 = vpack.c.b16 %v250, %v249
    %v260 = vpack.c.b16 %v252, %v251
    %269 = vmatpush.bf16.msra.mxu0 %v260
    %270 = vmatpush.bf16.msra.mxu0 %v259
    %271 = vmatpush.bf16.msra.mxu0 %v258
    %272 = vmatpush.bf16.msra.mxu0 %v257
    %273 = vmatpush.bf16.msra.mxu0 %v256
    %274 = vmatpush.bf16.msra.mxu0 %v255
    %275 = vmatpush.bf16.msra.mxu0 %v254
    %276 = vmatpush.bf16.msra.mxu0 %v253
    %277 = vmatmul.bf16.gmra.mxu0 %v203
    %v278 = vpop.f32.mrf.mxu0
    %v279 = vadd.f32 0.0, %v278
    %v280 = vpop.f32.mrf.mxu0
    %v281 = vadd.f32 0.0, %v280
    %282 = vmatmul.bf16.gmra.mxu0 %v204
    %v283 = vpop.f32.mrf.mxu0
    %v284 = vadd.f32 0.0, %v283
    %v285 = vpop.f32.mrf.mxu0
    %v286 = vadd.f32 0.0, %v285
    %287 = vdwg.mxu0
    %v288 = vld [vmem:[%s4] sm:$0x1]
    %v289 = vrot.slane %v279, 5
    %v290 = vrot.slane %v281, 5
    %v291 = vrot.slane %v284, 5
    %v292 = vrot.slane %v286, 5
    %vm293 = vcmp.lt.s32.totalorder %v54, 3
    %v294 = vsel %vm293, %v291, %v292
    %v295 = vsel %vm293, %v290, %v291
    %v296 = vsel %vm293, %v289, %v290
    %v297 = vsel %vm293, %v292, %v289
    %vm298 = vcmp.ge.s32.totalorder %v102, 3
    %vm299 = vcmp.ge.s32.totalorder %v103, 3
    %vm300 = vcmp.ge.s32.totalorder %v104, 3
    %vm301 = vcmp.ge.s32.totalorder %v105, 3
    %vm302 = vcmp.lt.s32.totalorder %v102, 19
    %vm303 = vcmp.lt.s32.totalorder %v103, 19
    %vm304 = vcmp.lt.s32.totalorder %v104, 19
    %vm305 = vcmp.lt.s32.totalorder %v105, 19
    %vm306 = vmand %vm298, %vm302
    %vm307 = vmand %vm299, %vm303
    %vm308 = vmand %vm300, %vm304
    %vm309 = vmand %vm301, %vm305
    %v310 = vsel %vm306, %v297, 0.0
    %v311 = vsel %vm307, %v296, 0.0
    %v312 = vsel %vm308, %v295, 0.0
    %v313 = vsel %vm309, %v294, 0.0
    %v314 = vperm.slane %v288, 0
    %v315 = vmul.f32 %v310, %v314
    %v316 = vmul.f32 %v311, %v314
    %v317 = vmul.f32 %v312, %v314
    %v318 = vmul.f32 %v313, %v314
    %v319 = vadd.f32 %v279, %v315
    %v320 = vadd.f32 %v281, %v316
    %v321 = vadd.f32 %v284, %v317
    %v322 = vadd.f32 %v286, %v318
    %v323 = vld [vmem:[%s4 + $0x1] sm:$0x1]
    %v324 = vrot.slane %v279, 6
    %v325 = vrot.slane %v281, 6
    %v326 = vrot.slane %v284, 6
    %v327 = vrot.slane %v286, 6
    %vm328 = vcmp.lt.s32.totalorder %v54, 2
    %v329 = vsel %vm328, %v326, %v327
    %v330 = vsel %vm328, %v325, %v326
    %v331 = vsel %vm328, %v324, %v325
    %v332 = vsel %vm328, %v327, %v324
    %vm333 = vcmp.ge.s32.totalorder %v102, 2
    %vm334 = vcmp.ge.s32.totalorder %v103, 2
    %vm335 = vcmp.ge.s32.totalorder %v104, 2
    %vm336 = vcmp.ge.s32.totalorder %v105, 2
    %vm337 = vcmp.lt.s32.totalorder %v102, 18
    %vm338 = vcmp.lt.s32.totalorder %v103, 18
    %vm339 = vcmp.lt.s32.totalorder %v104, 18
    %vm340 = vcmp.lt.s32.totalorder %v105, 18
    %vm341 = vmand %vm333, %vm337
    %vm342 = vmand %vm334, %vm338
    %vm343 = vmand %vm335, %vm339
    %vm344 = vmand %vm336, %vm340
    %v345 = vsel %vm341, %v332, 0.0
    %v346 = vsel %vm342, %v331, 0.0
    %v347 = vsel %vm343, %v330, 0.0
    %v348 = vsel %vm344, %v329, 0.0
    %v349 = vperm.slane %v323, 0
    %v350 = vmul.f32 %v345, %v349
    %v351 = vmul.f32 %v346, %v349
    %v352 = vmul.f32 %v347, %v349
    %v353 = vmul.f32 %v348, %v349
    %v354 = vadd.f32 %v319, %v350
    %v355 = vadd.f32 %v320, %v351
    %v356 = vadd.f32 %v321, %v352
    %v357 = vadd.f32 %v322, %v353
    %v358 = vld [vmem:[%s4 + $0x2] sm:$0x1]
    %v359 = vrot.slane %v279, 7
    %v360 = vrot.slane %v281, 7
    %v361 = vrot.slane %v284, 7
    %v362 = vrot.slane %v286, 7
    %vm363 = vcmp.lt.s32.totalorder %v54, 1
    %v364 = vsel %vm363, %v361, %v362
    %v365 = vsel %vm363, %v360, %v361
    %v366 = vsel %vm363, %v359, %v360
    %v367 = vsel %vm363, %v362, %v359
    %vm368 = vcmp.ge.s32.totalorder %v102, 1
    %vm369 = vcmp.ge.s32.totalorder %v103, 1
    %vm370 = vcmp.ge.s32.totalorder %v104, 1
    %vm371 = vcmp.ge.s32.totalorder %v105, 1
    %vm372 = vcmp.lt.s32.totalorder %v102, 17
    %vm373 = vcmp.lt.s32.totalorder %v103, 17
    %vm374 = vcmp.lt.s32.totalorder %v104, 17
    %vm375 = vcmp.lt.s32.totalorder %v105, 17
    %vm376 = vmand %vm368, %vm372
    %vm377 = vmand %vm369, %vm373
    %vm378 = vmand %vm370, %vm374
    %vm379 = vmand %vm371, %vm375
    %v380 = vsel %vm376, %v367, 0.0
    %v381 = vsel %vm377, %v366, 0.0
    %v382 = vsel %vm378, %v365, 0.0
    %v383 = vsel %vm379, %v364, 0.0
    %v384 = vperm.slane %v358, 0
    %v385 = vmul.f32 %v380, %v384
    %v386 = vmul.f32 %v381, %v384
    %v387 = vmul.f32 %v382, %v384
    %v388 = vmul.f32 %v383, %v384
    %v389 = vadd.f32 %v354, %v385
    %v390 = vadd.f32 %v355, %v386
    %v391 = vadd.f32 %v356, %v387
    %v392 = vadd.f32 %v357, %v388
    %v393 = vld [vmem:[%s4 + $0x3] sm:$0x1]
    %v394 = vperm.slane %v393, 0
    %v395 = vmul.f32 %v279, %v394
    %v396 = vmul.f32 %v281, %v394
    %v397 = vmul.f32 %v284, %v394
    %v398 = vmul.f32 %v286, %v394
    %v399 = vadd.f32 %v389, %v395
    %v400 = vadd.f32 %v390, %v396
    %v401 = vadd.f32 %v391, %v397
    %v402 = vadd.f32 %v392, %v398
    %v403 = vld [vmem:[%s4 + $0x4] sm:$0x1]
    %v404 = vrot.slane %v279, 1
    %v405 = vrot.slane %v281, 1
    %v406 = vrot.slane %v284, 1
    %v407 = vrot.slane %v286, 1
    %vm408 = vcmp.lt.s32.totalorder %v54, 7
    %v409 = vsel %vm408, %v406, %v407
    %v410 = vsel %vm408, %v405, %v406
    %v411 = vsel %vm408, %v404, %v405
    %v412 = vsel %vm408, %v407, %v404
    %vm413 = vcmp.ge.s32.totalorder %v102, 4294967295
    %vm414 = vcmp.ge.s32.totalorder %v103, 4294967295
    %vm415 = vcmp.ge.s32.totalorder %v104, 4294967295
    %vm416 = vcmp.ge.s32.totalorder %v105, 4294967295
    %vm417 = vcmp.lt.s32.totalorder %v102, 15
    %vm418 = vcmp.lt.s32.totalorder %v103, 15
    %vm419 = vcmp.lt.s32.totalorder %v104, 15
    %vm420 = vcmp.lt.s32.totalorder %v105, 15
    %vm421 = vmand %vm413, %vm417
    %vm422 = vmand %vm414, %vm418
    %vm423 = vmand %vm415, %vm419
    %vm424 = vmand %vm416, %vm420
    %v425 = vsel %vm421, %v411, 0.0
    %v426 = vsel %vm422, %v410, 0.0
    %v427 = vsel %vm423, %v409, 0.0
    %v428 = vsel %vm424, %v412, 0.0
    %v429 = vperm.slane %v403, 0
    %v430 = vmul.f32 %v425, %v429
    %v431 = vmul.f32 %v426, %v429
    %v432 = vmul.f32 %v427, %v429
    %v433 = vmul.f32 %v428, %v429
    %v434 = vadd.f32 %v399, %v430
    %v435 = vadd.f32 %v400, %v431
    %v436 = vadd.f32 %v401, %v432
    %v437 = vadd.f32 %v402, %v433
    %v438 = vpack.c.bf16 %v435, %v434
    %v439 = vpack.c.bf16 %v437, %v436
    %s440 = scalar_lea.vmem [#allocation2], 64
    %v441 = vld [vmem:[%s440] sm:$0xf]
    %v442 = vld [vmem:[%s440 + $0x4] sm:$0xf]
    %v443 = vld [vmem:[%s440 + $0x8] sm:$0xf]
    %v444 = vld [vmem:[%s440 + $0xc] sm:$0xf]
    %v445 = vld [vmem:[%s440 + $0x10] sm:$0xf]
    %v446 = vld [vmem:[%s440 + $0x14] sm:$0xf]
    %v447 = vld [vmem:[%s440 + $0x18] sm:$0xf]
    %v448 = vld [vmem:[%s440 + $0x1c] sm:$0xf]
    %v449 = vld [vmem:[%s440 + $0x20] sm:$0xf]
    %v450 = vld [vmem:[%s440 + $0x24] sm:$0xf]
    %v451 = vld [vmem:[%s440 + $0x28] sm:$0xf]
    %v452 = vld [vmem:[%s440 + $0x2c] sm:$0xf]
    %v453 = vld [vmem:[%s440 + $0x30] sm:$0xf]
    %v454 = vld [vmem:[%s440 + $0x34] sm:$0xf]
    %v455 = vld [vmem:[%s440 + $0x38] sm:$0xf]
    %v456 = vld [vmem:[%s440 + $0x3c] sm:$0xf]
    %s457 = scalar_lea.vmem %s2, 1
    %v458 = vld [vmem:[%s457] sm:$0x1]
    %v460 = vperm.slane %v458, 0
    %v478 = vunpack.c.l.b16 %v441
    %v479 = vunpack.c.l.b16 %v442
    %v480 = vunpack.c.l.b16 %v443
    %v481 = vunpack.c.l.b16 %v444
    %v482 = vunpack.c.l.b16 %v445
    %v483 = vunpack.c.l.b16 %v446
    %v484 = vunpack.c.l.b16 %v447
    %v485 = vunpack.c.l.b16 %v448
    %v486 = vunpack.c.l.b16 %v449
    %v487 = vunpack.c.l.b16 %v450
    %v488 = vunpack.c.l.b16 %v451
    %v489 = vunpack.c.l.b16 %v452
    %v490 = vunpack.c.l.b16 %v453
    %v491 = vunpack.c.l.b16 %v454
    %v492 = vunpack.c.l.b16 %v455
    %v493 = vunpack.c.l.b16 %v456
    %v494 = vpack.c.b16 %v479, %v478
    %v495 = vpack.c.b16 %v481, %v480
    %v496 = vpack.c.b16 %v483, %v482
    %v497 = vpack.c.b16 %v485, %v484
    %v498 = vpack.c.b16 %v487, %v486
    %v499 = vpack.c.b16 %v489, %v488
    %v500 = vpack.c.b16 %v491, %v490
    %v501 = vpack.c.b16 %v493, %v492
    %510 = vmatpush.bf16.msra.mxu0 %v501
    %511 = vmatpush.bf16.msra.mxu0 %v500
    %512 = vmatpush.bf16.msra.mxu0 %v499
    %513 = vmatpush.bf16.msra.mxu0 %v498
    %514 = vmatpush.bf16.msra.mxu0 %v497
    %515 = vmatpush.bf16.msra.mxu0 %v496
    %516 = vmatpush.bf16.msra.mxu0 %v495
    %517 = vmatpush.bf16.msra.mxu0 %v494
    %518 = vmatmul.bf16.gmra.mxu0 %v438
    %v519 = vpop.f32.mrf.mxu0
    %v520 = vadd.f32 %v460, %v519
    %v521 = vpop.f32.mrf.mxu0
    %v522 = vadd.f32 %v460, %v521
    %523 = vmatmul.bf16.gmra.mxu0 %v439
    %v524 = vpop.f32.mrf.mxu0
    %v525 = vadd.f32 %v460, %v524
    %v526 = vpop.f32.mrf.mxu0
    %v527 = vadd.f32 %v460, %v526
    %528 = vdwg.mxu0
    %v529 = vmax.f32 %v520, 0.0
    %v530 = vmax.f32 %v522, 0.0
    %v531 = vmax.f32 %v525, 0.0
    %v532 = vmax.f32 %v527, 0.0
    %v533 = vpack.c.bf16 %v530, %v529
    %v534 = vpack.c.bf16 %v532, %v531
    %s535 = scalar_lea.vmem [#allocation5], 64
    %v536 = vld [vmem:[%s535] sm:$0xf]
    %v537 = vld [vmem:[%s535 + $0x4] sm:$0xf]
    %v538 = vld [vmem:[%s535 + $0x8] sm:$0xf]
    %v539 = vld [vmem:[%s535 + $0xc] sm:$0xf]
    %v540 = vld [vmem:[%s535 + $0x10] sm:$0xf]
    %v541 = vld [vmem:[%s535 + $0x14] sm:$0xf]
    %v542 = vld [vmem:[%s535 + $0x18] sm:$0xf]
    %v543 = vld [vmem:[%s535 + $0x1c] sm:$0xf]
    %v544 = vld [vmem:[%s535 + $0x20] sm:$0xf]
    %v545 = vld [vmem:[%s535 + $0x24] sm:$0xf]
    %v546 = vld [vmem:[%s535 + $0x28] sm:$0xf]
    %v547 = vld [vmem:[%s535 + $0x2c] sm:$0xf]
    %v548 = vld [vmem:[%s535 + $0x30] sm:$0xf]
    %v549 = vld [vmem:[%s535 + $0x34] sm:$0xf]
    %v550 = vld [vmem:[%s535 + $0x38] sm:$0xf]
    %v551 = vld [vmem:[%s535 + $0x3c] sm:$0xf]
    %v568 = vunpack.c.l.b16 %v536
    %v569 = vunpack.c.l.b16 %v537
    %v570 = vunpack.c.l.b16 %v538
    %v571 = vunpack.c.l.b16 %v539
    %v572 = vunpack.c.l.b16 %v540
    %v573 = vunpack.c.l.b16 %v541
    %v574 = vunpack.c.l.b16 %v542
    %v575 = vunpack.c.l.b16 %v543
    %v576 = vunpack.c.l.b16 %v544
    %v577 = vunpack.c.l.b16 %v545
    %v578 = vunpack.c.l.b16 %v546
    %v579 = vunpack.c.l.b16 %v547
    %v580 = vunpack.c.l.b16 %v548
    %v581 = vunpack.c.l.b16 %v549
    %v582 = vunpack.c.l.b16 %v550
    %v583 = vunpack.c.l.b16 %v551
    %v584 = vpack.c.b16 %v569, %v568
    %v585 = vpack.c.b16 %v571, %v570
    %v586 = vpack.c.b16 %v573, %v572
    %v587 = vpack.c.b16 %v575, %v574
    %v588 = vpack.c.b16 %v577, %v576
    %v589 = vpack.c.b16 %v579, %v578
    %v590 = vpack.c.b16 %v581, %v580
    %v591 = vpack.c.b16 %v583, %v582
    %600 = vmatpush.bf16.msra.mxu0 %v591
    %601 = vmatpush.bf16.msra.mxu0 %v590
    %602 = vmatpush.bf16.msra.mxu0 %v589
    %603 = vmatpush.bf16.msra.mxu0 %v588
    %604 = vmatpush.bf16.msra.mxu0 %v587
    %605 = vmatpush.bf16.msra.mxu0 %v586
    %606 = vmatpush.bf16.msra.mxu0 %v585
    %607 = vmatpush.bf16.msra.mxu0 %v584
    %608 = vmatmul.bf16.gmra.mxu0 %v533
    %v609 = vpop.f32.mrf.mxu0
    %v610 = vadd.f32 0.0, %v609
    %v611 = vpop.f32.mrf.mxu0
    %v612 = vadd.f32 0.0, %v611
    %613 = vmatmul.bf16.gmra.mxu0 %v534
    %v614 = vpop.f32.mrf.mxu0
    %v615 = vadd.f32 0.0, %v614
    %v616 = vpop.f32.mrf.mxu0
    %v617 = vadd.f32 0.0, %v616
    %618 = vdwg.mxu0
    %s619 = scalar_lea.vmem %s4, 8
    %v620 = vld [vmem:[%s619] sm:$0x1]
    %v621 = vrot.slane %v610, 5
    %v622 = vrot.slane %v612, 5
    %v623 = vrot.slane %v615, 5
    %v624 = vrot.slane %v617, 5
    %v625 = vsel %vm293, %v623, %v624
    %v626 = vsel %vm293, %v622, %v623
    %v627 = vsel %vm293, %v621, %v622
    %v628 = vsel %vm293, %v624, %v621
    %v629 = vsel %vm306, %v628, 0.0
    %v630 = vsel %vm307, %v627, 0.0
    %v631 = vsel %vm308, %v626, 0.0
    %v632 = vsel %vm309, %v625, 0.0
    %v633 = vperm.slane %v620, 0
    %v634 = vmul.f32 %v629, %v633
    %v635 = vmul.f32 %v630, %v633
    %v636 = vmul.f32 %v631, %v633
    %v637 = vmul.f32 %v632, %v633
    %v638 = vadd.f32 %v610, %v634
    %v639 = vadd.f32 %v612, %v635
    %v640 = vadd.f32 %v615, %v636
    %v641 = vadd.f32 %v617, %v637
    %v642 = vld [vmem:[%s619 + $0x1] sm:$0x1]
    %v643 = vrot.slane %v610, 6
    %v644 = vrot.slane %v612, 6
    %v645 = vrot.slane %v615, 6
    %v646 = vrot.slane %v617, 6
    %v647 = vsel %vm328, %v645, %v646
    %v648 = vsel %vm328, %v644, %v645
    %v649 = vsel %vm328, %v643, %v644
    %v650 = vsel %vm328, %v646, %v643
    %v651 = vsel %vm341, %v650, 0.0
    %v652 = vsel %vm342, %v649, 0.0
    %v653 = vsel %vm343, %v648, 0.0
    %v654 = vsel %vm344, %v647, 0.0
    %v655 = vperm.slane %v642, 0
    %v656 = vmul.f32 %v651, %v655
    %v657 = vmul.f32 %v652, %v655
    %v658 = vmul.f32 %v653, %v655
    %v659 = vmul.f32 %v654, %v655
    %v660 = vadd.f32 %v638, %v656
    %v661 = vadd.f32 %v639, %v657
    %v662 = vadd.f32 %v640, %v658
    %v663 = vadd.f32 %v641, %v659
    %v664 = vld [vmem:[%s619 + $0x2] sm:$0x1]
    %v665 = vrot.slane %v610, 7
    %v666 = vrot.slane %v612, 7
    %v667 = vrot.slane %v615, 7
    %v668 = vrot.slane %v617, 7
    %v669 = vsel %vm363, %v667, %v668
    %v670 = vsel %vm363, %v666, %v667
    %v671 = vsel %vm363, %v665, %v666
    %v672 = vsel %vm363, %v668, %v665
    %v673 = vsel %vm376, %v672, 0.0
    %v674 = vsel %vm377, %v671, 0.0
    %v675 = vsel %vm378, %v670, 0.0
    %v676 = vsel %vm379, %v669, 0.0
    %v677 = vperm.slane %v664, 0
    %v678 = vmul.f32 %v673, %v677
    %v679 = vmul.f32 %v674, %v677
    %v680 = vmul.f32 %v675, %v677
    %v681 = vmul.f32 %v676, %v677
    %v682 = vadd.f32 %v660, %v678
    %v683 = vadd.f32 %v661, %v679
    %v684 = vadd.f32 %v662, %v680
    %v685 = vadd.f32 %v663, %v681
    %v686 = vld [vmem:[%s619 + $0x3] sm:$0x1]
    %v687 = vperm.slane %v686, 0
    %v688 = vmul.f32 %v610, %v687
    %v689 = vmul.f32 %v612, %v687
    %v690 = vmul.f32 %v615, %v687
    %v691 = vmul.f32 %v617, %v687
    %v692 = vadd.f32 %v682, %v688
    %v693 = vadd.f32 %v683, %v689
    %v694 = vadd.f32 %v684, %v690
    %v695 = vadd.f32 %v685, %v691
    %v696 = vld [vmem:[%s619 + $0x4] sm:$0x1]
    %v697 = vrot.slane %v610, 1
    %v698 = vrot.slane %v612, 1
    %v699 = vrot.slane %v615, 1
    %v700 = vrot.slane %v617, 1
    %v701 = vsel %vm408, %v699, %v700
    %v702 = vsel %vm408, %v698, %v699
    %v703 = vsel %vm408, %v697, %v698
    %v704 = vsel %vm408, %v700, %v697
    %v705 = vsel %vm421, %v703, 0.0
    %v706 = vsel %vm422, %v702, 0.0
    %v707 = vsel %vm423, %v701, 0.0
    %v708 = vsel %vm424, %v704, 0.0
    %v709 = vperm.slane %v696, 0
    %v710 = vmul.f32 %v705, %v709
    %v711 = vmul.f32 %v706, %v709
    %v712 = vmul.f32 %v707, %v709
    %v713 = vmul.f32 %v708, %v709
    %v714 = vadd.f32 %v692, %v710
    %v715 = vadd.f32 %v693, %v711
    %v716 = vadd.f32 %v694, %v712
    %v717 = vadd.f32 %v695, %v713
    %v718 = vadd.f32 %v714, %v434
    %v719 = vadd.f32 %v715, %v435
    %v720 = vadd.f32 %v716, %v436
    %v721 = vadd.f32 %v717, %v437
    %v722 = vpack.c.bf16 %v719, %v718
    %v723 = vpack.c.bf16 %v721, %v720
    %s724 = scalar_lea.vmem [#allocation2], 128
    %v725 = vld [vmem:[%s724] sm:$0xf]
    %v726 = vld [vmem:[%s724 + $0x4] sm:$0xf]
    %v727 = vld [vmem:[%s724 + $0x8] sm:$0xf]
    %v728 = vld [vmem:[%s724 + $0xc] sm:$0xf]
    %v729 = vld [vmem:[%s724 + $0x10] sm:$0xf]
    %v730 = vld [vmem:[%s724 + $0x14] sm:$0xf]
    %v731 = vld [vmem:[%s724 + $0x18] sm:$0xf]
    %v732 = vld [vmem:[%s724 + $0x1c] sm:$0xf]
    %v733 = vld [vmem:[%s724 + $0x20] sm:$0xf]
    %v734 = vld [vmem:[%s724 + $0x24] sm:$0xf]
    %v735 = vld [vmem:[%s724 + $0x28] sm:$0xf]
    %v736 = vld [vmem:[%s724 + $0x2c] sm:$0xf]
    %v737 = vld [vmem:[%s724 + $0x30] sm:$0xf]
    %v738 = vld [vmem:[%s724 + $0x34] sm:$0xf]
    %v739 = vld [vmem:[%s724 + $0x38] sm:$0xf]
    %v740 = vld [vmem:[%s724 + $0x3c] sm:$0xf]
    %s741 = scalar_lea.vmem %s2, 2
    %v742 = vld [vmem:[%s741] sm:$0x1]
    %v744 = vperm.slane %v742, 0
    %v762 = vunpack.c.l.b16 %v725
    %v763 = vunpack.c.l.b16 %v726
    %v764 = vunpack.c.l.b16 %v727
    %v765 = vunpack.c.l.b16 %v728
    %v766 = vunpack.c.l.b16 %v729
    %v767 = vunpack.c.l.b16 %v730
    %v768 = vunpack.c.l.b16 %v731
    %v769 = vunpack.c.l.b16 %v732
    %v770 = vunpack.c.l.b16 %v733
    %v771 = vunpack.c.l.b16 %v734
    %v772 = vunpack.c.l.b16 %v735
    %v773 = vunpack.c.l.b16 %v736
    %v774 = vunpack.c.l.b16 %v737
    %v775 = vunpack.c.l.b16 %v738
    %v776 = vunpack.c.l.b16 %v739
    %v777 = vunpack.c.l.b16 %v740
    %v778 = vpack.c.b16 %v763, %v762
    %v779 = vpack.c.b16 %v765, %v764
    %v780 = vpack.c.b16 %v767, %v766
    %v781 = vpack.c.b16 %v769, %v768
    %v782 = vpack.c.b16 %v771, %v770
    %v783 = vpack.c.b16 %v773, %v772
    %v784 = vpack.c.b16 %v775, %v774
    %v785 = vpack.c.b16 %v777, %v776
    %794 = vmatpush.bf16.msra.mxu0 %v785
    %795 = vmatpush.bf16.msra.mxu0 %v784
    %796 = vmatpush.bf16.msra.mxu0 %v783
    %797 = vmatpush.bf16.msra.mxu0 %v782
    %798 = vmatpush.bf16.msra.mxu0 %v781
    %799 = vmatpush.bf16.msra.mxu0 %v780
    %800 = vmatpush.bf16.msra.mxu0 %v779
    %801 = vmatpush.bf16.msra.mxu0 %v778
    %802 = vmatmul.bf16.gmra.mxu0 %v722
    %v803 = vpop.f32.mrf.mxu0
    %v804 = vadd.f32 %v744, %v803
    %v805 = vpop.f32.mrf.mxu0
    %v806 = vadd.f32 %v744, %v805
    %807 = vmatmul.bf16.gmra.mxu0 %v723
    %v808 = vpop.f32.mrf.mxu0
    %v809 = vadd.f32 %v744, %v808
    %v810 = vpop.f32.mrf.mxu0
    %v811 = vadd.f32 %v744, %v810
    %812 = vdwg.mxu0
    %v813 = vmax.f32 %v804, 0.0
    %v814 = vmax.f32 %v806, 0.0
    %v815 = vmax.f32 %v809, 0.0
    %v816 = vmax.f32 %v811, 0.0
    %v817 = vpack.c.bf16 %v814, %v813
    %v818 = vpack.c.bf16 %v816, %v815
    %s819 = scalar_lea.vmem [#allocation5], 128
    %v820 = vld [vmem:[%s819] sm:$0xf]
    %v821 = vld [vmem:[%s819 + $0x4] sm:$0xf]
    %v822 = vld [vmem:[%s819 + $0x8] sm:$0xf]
    %v823 = vld [vmem:[%s819 + $0xc] sm:$0xf]
    %v824 = vld [vmem:[%s819 + $0x10] sm:$0xf]
    %v825 = vld [vmem:[%s819 + $0x14] sm:$0xf]
    %v826 = vld [vmem:[%s819 + $0x18] sm:$0xf]
    %v827 = vld [vmem:[%s819 + $0x1c] sm:$0xf]
    %v828 = vld [vmem:[%s819 + $0x20] sm:$0xf]
    %v829 = vld [vmem:[%s819 + $0x24] sm:$0xf]
    %v830 = vld [vmem:[%s819 + $0x28] sm:$0xf]
    %v831 = vld [vmem:[%s819 + $0x2c] sm:$0xf]
    %v832 = vld [vmem:[%s819 + $0x30] sm:$0xf]
    %v833 = vld [vmem:[%s819 + $0x34] sm:$0xf]
    %v834 = vld [vmem:[%s819 + $0x38] sm:$0xf]
    %v835 = vld [vmem:[%s819 + $0x3c] sm:$0xf]
    %v852 = vunpack.c.l.b16 %v820
    %v853 = vunpack.c.l.b16 %v821
    %v854 = vunpack.c.l.b16 %v822
    %v855 = vunpack.c.l.b16 %v823
    %v856 = vunpack.c.l.b16 %v824
    %v857 = vunpack.c.l.b16 %v825
    %v858 = vunpack.c.l.b16 %v826
    %v859 = vunpack.c.l.b16 %v827
    %v860 = vunpack.c.l.b16 %v828
    %v861 = vunpack.c.l.b16 %v829
    %v862 = vunpack.c.l.b16 %v830
    %v863 = vunpack.c.l.b16 %v831
    %v864 = vunpack.c.l.b16 %v832
    %v865 = vunpack.c.l.b16 %v833
    %v866 = vunpack.c.l.b16 %v834
    %v867 = vunpack.c.l.b16 %v835
    %v868 = vpack.c.b16 %v853, %v852
    %v869 = vpack.c.b16 %v855, %v854
    %v870 = vpack.c.b16 %v857, %v856
    %v871 = vpack.c.b16 %v859, %v858
    %v872 = vpack.c.b16 %v861, %v860
    %v873 = vpack.c.b16 %v863, %v862
    %v874 = vpack.c.b16 %v865, %v864
    %v875 = vpack.c.b16 %v867, %v866
    %884 = vmatpush.bf16.msra.mxu0 %v875
    %885 = vmatpush.bf16.msra.mxu0 %v874
    %886 = vmatpush.bf16.msra.mxu0 %v873
    %887 = vmatpush.bf16.msra.mxu0 %v872
    %888 = vmatpush.bf16.msra.mxu0 %v871
    %889 = vmatpush.bf16.msra.mxu0 %v870
    %890 = vmatpush.bf16.msra.mxu0 %v869
    %891 = vmatpush.bf16.msra.mxu0 %v868
    %892 = vmatmul.bf16.gmra.mxu0 %v817
    %v893 = vpop.f32.mrf.mxu0
    %v894 = vadd.f32 0.0, %v893
    %v895 = vpop.f32.mrf.mxu0
    %v896 = vadd.f32 0.0, %v895
    %897 = vmatmul.bf16.gmra.mxu0 %v818
    %v898 = vpop.f32.mrf.mxu0
    %v899 = vadd.f32 0.0, %v898
    %v900 = vpop.f32.mrf.mxu0
    %v901 = vadd.f32 0.0, %v900
    %902 = vdwg.mxu0
    %s903 = scalar_lea.vmem %s4, 16
    %v904 = vld [vmem:[%s903] sm:$0x1]
    %v905 = vrot.slane %v894, 5
    %v906 = vrot.slane %v896, 5
    %v907 = vrot.slane %v899, 5
    %v908 = vrot.slane %v901, 5
    %v909 = vsel %vm293, %v907, %v908
    %v910 = vsel %vm293, %v906, %v907
    %v911 = vsel %vm293, %v905, %v906
    %v912 = vsel %vm293, %v908, %v905
    %v913 = vsel %vm306, %v912, 0.0
    %v914 = vsel %vm307, %v911, 0.0
    %v915 = vsel %vm308, %v910, 0.0
    %v916 = vsel %vm309, %v909, 0.0
    %v917 = vperm.slane %v904, 0
    %v918 = vmul.f32 %v913, %v917
    %v919 = vmul.f32 %v914, %v917
    %v920 = vmul.f32 %v915, %v917
    %v921 = vmul.f32 %v916, %v917
    %v922 = vadd.f32 %v894, %v918
    %v923 = vadd.f32 %v896, %v919
    %v924 = vadd.f32 %v899, %v920
    %v925 = vadd.f32 %v901, %v921
    %v926 = vld [vmem:[%s903 + $0x1] sm:$0x1]
    %v927 = vrot.slane %v894, 6
    %v928 = vrot.slane %v896, 6
    %v929 = vrot.slane %v899, 6
    %v930 = vrot.slane %v901, 6
    %v931 = vsel %vm328, %v929, %v930
    %v932 = vsel %vm328, %v928, %v929
    %v933 = vsel %vm328, %v927, %v928
    %v934 = vsel %vm328, %v930, %v927
    %v935 = vsel %vm341, %v934, 0.0
    %v936 = vsel %vm342, %v933, 0.0
    %v937 = vsel %vm343, %v932, 0.0
    %v938 = vsel %vm344, %v931, 0.0
    %v939 = vperm.slane %v926, 0
    %v940 = vmul.f32 %v935, %v939
    %v941 = vmul.f32 %v936, %v939
    %v942 = vmul.f32 %v937, %v939
    %v943 = vmul.f32 %v938, %v939
    %v944 = vadd.f32 %v922, %v940
    %v945 = vadd.f32 %v923, %v941
    %v946 = vadd.f32 %v924, %v942
    %v947 = vadd.f32 %v925, %v943
    %v948 = vld [vmem:[%s903 + $0x2] sm:$0x1]
    %v949 = vrot.slane %v894, 7
    %v950 = vrot.slane %v896, 7
    %v951 = vrot.slane %v899, 7
    %v952 = vrot.slane %v901, 7
    %v953 = vsel %vm363, %v951, %v952
    %v954 = vsel %vm363, %v950, %v951
    %v955 = vsel %vm363, %v949, %v950
    %v956 = vsel %vm363, %v952, %v949
    %v957 = vsel %vm376, %v956, 0.0
    %v958 = vsel %vm377, %v955, 0.0
    %v959 = vsel %vm378, %v954, 0.0
    %v960 = vsel %vm379, %v953, 0.0
    %v961 = vperm.slane %v948, 0
    %v962 = vmul.f32 %v957, %v961
    %v963 = vmul.f32 %v958, %v961
    %v964 = vmul.f32 %v959, %v961
    %v965 = vmul.f32 %v960, %v961
    %v966 = vadd.f32 %v944, %v962
    %v967 = vadd.f32 %v945, %v963
    %v968 = vadd.f32 %v946, %v964
    %v969 = vadd.f32 %v947, %v965
    %v970 = vld [vmem:[%s903 + $0x3] sm:$0x1]
    %v971 = vperm.slane %v970, 0
    %v972 = vmul.f32 %v894, %v971
    %v973 = vmul.f32 %v896, %v971
    %v974 = vmul.f32 %v899, %v971
    %v975 = vmul.f32 %v901, %v971
    %v976 = vadd.f32 %v966, %v972
    %v977 = vadd.f32 %v967, %v973
    %v978 = vadd.f32 %v968, %v974
    %v979 = vadd.f32 %v969, %v975
    %v980 = vld [vmem:[%s903 + $0x4] sm:$0x1]
    %v981 = vrot.slane %v894, 1
    %v982 = vrot.slane %v896, 1
    %v983 = vrot.slane %v899, 1
    %v984 = vrot.slane %v901, 1
    %v985 = vsel %vm408, %v983, %v984
    %v986 = vsel %vm408, %v982, %v983
    %v987 = vsel %vm408, %v981, %v982
    %v988 = vsel %vm408, %v984, %v981
    %v989 = vsel %vm421, %v987, 0.0
    %v990 = vsel %vm422, %v986, 0.0
    %v991 = vsel %vm423, %v985, 0.0
    %v992 = vsel %vm424, %v988, 0.0
    %v993 = vperm.slane %v980, 0
    %v994 = vmul.f32 %v989, %v993
    %v995 = vmul.f32 %v990, %v993
    %v996 = vmul.f32 %v991, %v993
    %v997 = vmul.f32 %v992, %v993
    %v998 = vadd.f32 %v976, %v994
    %v999 = vadd.f32 %v977, %v995
    %v1000 = vadd.f32 %v978, %v996
    %v1001 = vadd.f32 %v979, %v997
    %v1002 = vadd.f32 %v998, %v718
    %v1003 = vadd.f32 %v999, %v719
    %v1004 = vadd.f32 %v1000, %v720
    %v1005 = vadd.f32 %v1001, %v721
    %1006 = vst [vmem:[#allocation7] sm:$0xff] %v1002
    %1007 = vst [vmem:[#allocation7 + $0x8] sm:$0xff] %v1003
    %1008 = vst [vmem:[#allocation7 + $0x10] sm:$0xff] %v1004
    %1009 = vst [vmem:[#allocation7 + $0x18] sm:$0xff] %v1005
    // Predicated region
    $region30: #{tpu_custom_call.1} parent=1 // pred_check
      _
    $region31: #{tpu_custom_call.1} parent=1 // pred_check_branch
      %1011 = sbr.rel (0) target = $region33
    $region32: #{tpu_custom_call.1} parent=1 // pred_region
      %1013 = vsyncadd [#allocation4], 0
      %s1014 = sshll.u32 [#allocation7], 4
      %s1015 = int_to_ptr.vmem [resolvable:$true] %s1014
      %s1016 = sshll.u32 %s5, 4
      %s1017 = int_to_ptr.hbm [resolvable:$true] %s1016
      %1022 = dma.vmem_to_hbm [thread:$0]  %s1015, 512, %s1017, [#allocation4], 128, 128, 8
    $region33: #{tpu_custom_call.1} parent=1 // pred_fallthru
      _
    // Predicated region
    $region34: #{tpu_custom_call.1} parent=1 // pred_check
      _
    $region35: #{tpu_custom_call.1} parent=1 // pred_check_branch
      %1024 = sbr.rel (0) target = $region37
    $region36: #{tpu_custom_call.1} parent=1 // pred_region
      %1026 = dma.done [#allocation4], 512
    $region37: #{tpu_custom_call.1} parent=1 // pred_fallthru
      _
    %1027 = vsyncpa [#allocation3], 1
    %1028 = vsyncpa [#allocation6], 1
    %1029 = vsyncpa [#allocation4], 1

</llo_original>
